<compile_context>
chip_gen: v6e
topology: v6e:2x2x1
jax: 0.10.0
libtpu: 0.0.40
codegen_flags: <defaults>
</compile_context>

<pallas_src>
import jax
import jax.numpy as jnp
from jax import lax
from jax.experimental import pallas as pl
from jax.experimental.pallas import tpu as pltpu


_LANE = 128      # lane width: feature dims padded to this
_B_TILE = 8      # bag (batch) tile: sublane width
_V_TILE = 256    # vocab tile streamed from HBM (256 = v6e/v7x MXU array width)


def _round_up(n, m):
    return ((n + m - 1) // m) * m


# -----------------------------------------------------------------------------
# Kernel: one (bag-block, vocab-tile) grid step.
# -----------------------------------------------------------------------------
def _make_kernel(n_layers, b_tile, v_tile):
    def kernel(ids_ref, emb_ref, *rest):
        # rest = (W0, b0, W1, b1, ..., out_ref, acc_ref)
        acc_ref = rest[-1]
        out_ref = rest[-2]
        wb_refs = rest[:-2]

        t_pad = ids_ref.shape[1]
        bi = pl.program_id(0)
        vi = pl.program_id(1)
        nv = pl.num_programs(1)

        ids = ids_ref[...]                      # [8, T_pad] int32 (lane-dense pack)
        tok_row = ids[0:1, :]                   # [1, T_pad] token ids   (pad = -1)
        bag_row = ids[1:2, :]                   # [1, T_pad] bag ids     (pad = -1)

        # sel[b, t] = 1 iff token t belongs to (global) bag b.  f32 elementwise.
        b_iota = lax.broadcasted_iota(jnp.int32, (b_tile, t_pad), 0) + bi * b_tile
        sel = (bag_row == b_iota).astype(jnp.float32)                # [b_tile, T_pad]

        # Per-V-tile one-hot, transposed: onehot_vt[v, t] = 1 iff token t == vocab v.
        v_iota = lax.broadcasted_iota(jnp.int32, (v_tile, t_pad), 0) + vi * v_tile
        onehot_vt = (tok_row == v_iota).astype(jnp.bfloat16)         # [v_tile, T_pad]

        # counts_bv[b, v] = #tokens of vocab id v inside bag b.
        # Contract T on the last dim of both operands (QK^T pattern) -> no transpose.
        counts_bv = lax.dot_general(
            sel.astype(jnp.bfloat16), onehot_vt,
            dimension_numbers=(((1,), (1,)), ((), ())),
            preferred_element_type=jnp.float32)                      # [b_tile, v_tile]

        @pl.when(vi == 0)
        def _():
            acc_ref[...] = jnp.zeros_like(acc_ref)

        # Per-bag embedding sums: acc += counts_bv @ E_tile   (counts exact in bf16).
        acc_ref[...] += jnp.dot(counts_bv.astype(jnp.bfloat16), emb_ref[...],
                                preferred_element_type=jnp.float32)  # [b_tile, D_pad]

        @pl.when(vi == nv - 1)
        def _():
            # EmbeddingBag mean: divide by token count (empty bag -> count 1 -> zeros).
            n_tok = jnp.sum(sel, axis=1, keepdims=True)              # [b_tile, 1]
            inv = pl.reciprocal(jnp.maximum(n_tok, 1.0), approx=True)
            h = acc_ref[...] * inv                                   # f32 [b_tile, D_pad]

            # MLP head: (Linear + ReLU [+ Dropout=identity]) * N  + Linear(4).
            for li in range(n_layers):
                w = wb_refs[2 * li][...]                             # bf16 [in, out]
                b = wb_refs[2 * li + 1][...]                         # f32  [b_tile, out]
                h = jnp.dot(h.astype(jnp.bfloat16), w,
                            preferred_element_type=jnp.float32) + b
                if li < n_layers - 1:
                    h = jnp.maximum(h, 0.0)  # ReLU; Dropout = identity (eval mode)

            out_ref[...] = h

    return kernel


# -----------------------------------------------------------------------------
# Wrapper: pad to aligned shapes, build the grid, call the kernel.
# -----------------------------------------------------------------------------
def text_net_forward(emb_table, params, text, offsets):
    V, D = emb_table.shape
    T = int(text.shape[0])
    B = int(offsets.shape[0])
    n_layers = len(params)
    out_dim = params[-1][0].shape[1]

    D_pad = _round_up(D, _LANE)
    T_pad = _round_up(T, _LANE)
    B_pad = _round_up(B, _B_TILE)
    V_pad = _round_up(V, _V_TILE)

    # Embedding table: zero-padded, bf16 for the MXU. Stays in HBM; V tiles streamed.
    emb_p = jnp.zeros((V_pad, D_pad), jnp.float32).at[:V, :D].set(
        emb_table.astype(jnp.float32)).astype(jnp.bfloat16)

    # Single lane-dense int32 pack: row 0 = token ids, row 1 = per-token bag id.
    tok = jnp.full((T_pad,), -1, jnp.int32).at[:T].set(text.astype(jnp.int32))
    t_idx = jnp.arange(T, dtype=jnp.int32)
    bag_ids = (jnp.sum(t_idx[:, None] >= offsets[None, :].astype(jnp.int32),
                       axis=1) - 1).astype(jnp.int32)
    bag = jnp.full((T_pad,), -1, jnp.int32).at[:T].set(bag_ids)
    ids = jnp.full((_B_TILE, T_pad), -1, jnp.int32).at[0].set(tok).at[1].set(bag)

    # Linear weights (bf16, zero-padded feature dims) and biases (f32, replicated
    # across the bag tile so the in-kernel add is a plain elementwise op).
    flat = []
    in_pad = D_pad
    for W, b in params:
        di, do = W.shape
        do_pad = _round_up(do, _LANE)
        Wp = jnp.zeros((in_pad, do_pad), jnp.float32).at[:di, :do].set(
            W.astype(jnp.float32)).astype(jnp.bfloat16)
        brow = b.reshape(1, -1).astype(jnp.float32)
        bp = jnp.zeros((_B_TILE, do_pad), jnp.float32).at[:, :do].set(
            jnp.broadcast_to(brow, (_B_TILE, do)))
        flat += [Wp, bp]
        in_pad = do_pad
    out_pad = in_pad

    grid = (B_pad // _B_TILE, V_pad // _V_TILE)

    in_specs = [
        # token/bag pack: resident across all grid steps.
        pl.BlockSpec((_B_TILE, T_pad), lambda bi, vi: (0, 0)),
        # embedding table: streamed V tile by V tile (double-buffered by Pallas).
        pl.BlockSpec((_V_TILE, D_pad), lambda bi, vi: (vi, 0)),
    ]
    for arr in flat:
        in_specs.append(pl.BlockSpec(arr.shape, lambda bi, vi: (0, 0)))

    out = pl.pallas_call(
        _make_kernel(n_layers, _B_TILE, _V_TILE),
        out_shape=jax.ShapeDtypeStruct((B_pad, out_pad), jnp.float32),
        grid_spec=pltpu.PrefetchScalarGridSpec(
            num_scalar_prefetch=0,
            grid=grid,
            in_specs=in_specs,
            out_specs=pl.BlockSpec((_B_TILE, out_pad), lambda bi, vi: (bi, 0)),
            scratch_shapes=[pltpu.VMEM((_B_TILE, D_pad), jnp.float32)],
        ),
        compiler_params=pltpu.CompilerParams(
            dimension_semantics=("parallel", "arbitrary")),
    )(ids, emb_p, *flat)

    # Strip padding: real bags, real output features (4).
    return out[:B, :out_dim]


# -----------------------------------------------------------------------------
# Parameter init mirroring Text_Net.init_weights():
#   embedding ~ U(-0.5, 0.5); Linear weights ~ U(-0.5, 0.5); biases = 0.
# Weights stored transposed ([in, out]) so the kernel computes x @ W + b.
# -----------------------------------------------------------------------------
def init_text_net_params(key, vocab_size, embed_dim, output_dims):
    initrange = 0.5
    dims = list(output_dims) + [4]
    keys = jax.random.split(key, 1 + len(dims))
    emb = jax.random.uniform(keys[0], (vocab_size, embed_dim), jnp.float32,
                             -initrange, initrange)
    params = []
    in_f = embed_dim
    for i, dim in enumerate(dims):
        W = jax.random.uniform(keys[1 + i], (in_f, dim), jnp.float32,
                               -initrange, initrange)
        b = jnp.zeros((1, dim), jnp.float32)
        params.append((W, b))
        in_f = dim
    return emb, params


# -----------------------------------------------------------------------------
# Pure-JAX reference.  bf16=True mimics the kernel's bf16-at-the-MXU-boundary
# quantization (f32 accumulation) so the comparison isolates structural correctness.
# -----------------------------------------------------------------------------
def _q_bf16(x):
    return x.astype(jnp.bfloat16).astype(jnp.float32)


def text_net_reference(emb_table, params, text, offsets, *, bf16=False):
    T = int(text.shape[0])
    B = int(offsets.shape[0])
    E = _q_bf16(emb_table) if bf16 else emb_table.astype(jnp.float32)
    off_ext = [int(o) for o in offsets] + [T]
    gathered = E[text]                                   # [T, D]
    rows = []
    for b in range(B):
        s, e = off_ext[b], off_ext[b + 1]
        rows.append(jnp.mean(gathered[s:e], axis=0) if e > s
                    else jnp.zeros((E.shape[1],), jnp.float32))
    h = jnp.stack(rows, axis=0)
    n = len(params)
    for i, (W, bias) in enumerate(params):
        Wq = _q_bf16(W) if bf16 else W
        hq = _q_bf16(h) if bf16 else h
        h = jnp.dot(hq, Wq, precision=lax.Precision.HIGHEST) + bias.reshape(1, -1)
        if i < n - 1:
            h = jnp.maximum(h, 0.0)
    return h


if __name__ == "__main__":
    # Small, module-consistent shapes.
    vocab_size = 64
    embed_dim = 32
    output_dims = (32, 16)
    B = 4        # number of bags (batch)
    T = 24       # total flattened token count

    key = jax.random.PRNGKey(0)
    k_param, k_text = jax.random.split(key)

    emb_table, params = init_text_net_params(k_param, vocab_size, embed_dim,
                                             output_dims)

    text = jax.random.randint(k_text, (T,), 0, vocab_size, dtype=jnp.int32)
    offsets = jnp.array([0, 5, 12, 18], dtype=jnp.int32)  # bag start indices, len == B

    out = jax.block_until_ready(text_net_forward(emb_table, params, text, offsets))

    # Compare against a bf16-quantization-aware f32-accumulation reference
    # (tolerance covers the approx reciprocal + accumulation-order differences).
    ref = text_net_reference(emb_table, params, text, offsets, bf16=True)
    assert out.shape == (B, 4), out.shape
    assert jnp.allclose(out, ref, atol=1e-2, rtol=1e-2), (out, ref)

    print("KERNEL_OK")
</pallas_src>

<mosaic_0001>
module attributes {stable_mosaic.version = 11 : i64} {
  func.func @kernel(%arg0: i32, %arg1: i32, %arg2: memref<8x128xi32, #tpu.memory_space<vmem>>, %arg3: memref<256x128xbf16, #tpu.memory_space<vmem>>, %arg4: memref<128x128xbf16, #tpu.memory_space<vmem>>, %arg5: memref<8x128xf32, #tpu.memory_space<vmem>>, %arg6: memref<128x128xbf16, #tpu.memory_space<vmem>>, %arg7: memref<8x128xf32, #tpu.memory_space<vmem>>, %arg8: memref<128x128xbf16, #tpu.memory_space<vmem>>, %arg9: memref<8x128xf32, #tpu.memory_space<vmem>>, %arg10: memref<8x128xf32, #tpu.memory_space<vmem>>, %arg11: memref<8x128xf32, #tpu.memory_space<vmem>>) attributes {dimension_semantics = [#tpu.dimension_semantics<parallel>, #tpu.dimension_semantics<arbitrary>], iteration_bounds = array<i64: 1, 1>, scalar_prefetch = 0 : i64, scratch_operands = 1 : i64, tpu.core_type = #tpu.core_type<tc>, window_params = [{pipeline_mode = #tpu.pipeline_mode<synchronous>, transform_indices = @transform_0, window_bounds = array<i64: 8, 128>}, {transform_indices = @transform_1, window_bounds = array<i64: 256, 128>}, {pipeline_mode = #tpu.pipeline_mode<synchronous>, transform_indices = @transform_2, window_bounds = array<i64: 128, 128>}, {pipeline_mode = #tpu.pipeline_mode<synchronous>, transform_indices = @transform_3, window_bounds = array<i64: 8, 128>}, {pipeline_mode = #tpu.pipeline_mode<synchronous>, transform_indices = @transform_4, window_bounds = array<i64: 128, 128>}, {pipeline_mode = #tpu.pipeline_mode<synchronous>, transform_indices = @transform_5, window_bounds = array<i64: 8, 128>}, {pipeline_mode = #tpu.pipeline_mode<synchronous>, transform_indices = @transform_6, window_bounds = array<i64: 128, 128>}, {pipeline_mode = #tpu.pipeline_mode<synchronous>, transform_indices = @transform_7, window_bounds = array<i64: 8, 128>}, {transform_indices = @transform_8, window_bounds = array<i64: 8, 128>}]} {
    %c0 = arith.constant 0 : index
    %c0_0 = arith.constant 0 : index
    %0 = vector.load %arg2[%c0, %c0_0] : memref<8x128xi32, #tpu.memory_space<vmem>>, vector<8x128xi32>
    %1 = vector.extract_strided_slice %0 {offsets = [0, 0], sizes = [1, 128], strides = [1, 1]} : vector<8x128xi32> to vector<1x128xi32>
    %2 = vector.extract_strided_slice %0 {offsets = [1, 0], sizes = [1, 128], strides = [1, 1]} : vector<8x128xi32> to vector<1x128xi32>
    %3 = tpu.iota {dimensions = array<i32: 0>} : vector<8x128xi32>
    %c8_i32 = arith.constant 8 : i32
    %4 = arith.muli %arg0, %c8_i32 : i32
    %5 = vector.broadcast %4 : i32 to vector<8x128xi32>
    %6 = arith.addi %3, %5 : vector<8x128xi32>
    %7 = vector.broadcast %2 : vector<1x128xi32> to vector<8x128xi32>
    %8 = arith.cmpi eq, %7, %6 : vector<8x128xi32>
    %9 = arith.extui %8 : vector<8x128xi1> to vector<8x128xi32>
    %10 = arith.sitofp %9 : vector<8x128xi32> to vector<8x128xf32>
    %11 = tpu.iota {dimensions = array<i32: 0>} : vector<256x128xi32>
    %c256_i32 = arith.constant 256 : i32
    %12 = arith.muli %arg1, %c256_i32 : i32
    %13 = vector.broadcast %12 : i32 to vector<256x128xi32>
    %14 = arith.addi %11, %13 : vector<256x128xi32>
    %15 = vector.broadcast %1 : vector<1x128xi32> to vector<256x128xi32>
    %16 = arith.cmpi eq, %15, %14 : vector<256x128xi32>
    %17 = arith.extui %16 : vector<256x128xi1> to vector<256x128xi32>
    %18 = arith.sitofp %17 : vector<256x128xi32> to vector<256x128xf32>
    %19 = arith.truncf %18 : vector<256x128xf32> to vector<256x128xbf16>
    %20 = arith.truncf %10 : vector<8x128xf32> to vector<8x128xbf16>
    %cst = arith.constant dense<0.000000e+00> : vector<8x256xf32>
    %21 = tpu.matmul %20, %19, %cst {dimension_numbers = #tpu.dot_dimension_numbers<[1], [1], [0], [0], [0, 0, 1, 0], [], []>} : vector<8x128xbf16>, vector<256x128xbf16>, vector<8x256xf32> -> vector<8x256xf32>
    %c0_i32 = arith.constant 0 : i32
    %22 = arith.cmpi eq, %arg1, %c0_i32 : i32
    %23 = arith.extui %22 : i1 to i32
    %c0_i32_1 = arith.constant 0 : i32
    %24 = arith.cmpi ne, %23, %c0_i32_1 : i32
    scf.if %24 {
      %cst_11 = arith.constant 0.000000e+00 : f32
      %34 = vector.broadcast %cst_11 : f32 to vector<8x128xf32>
      %c0_12 = arith.constant 0 : index
      %c0_13 = arith.constant 0 : index
      %35 = vector.load %arg11[%c0_12, %c0_13] : memref<8x128xf32, #tpu.memory_space<vmem>>, vector<8x128xf32>
      tpu.vector_store %arg11[%c0_12, %c0_13], %34 {strides = array<i32>} : memref<8x128xf32, #tpu.memory_space<vmem>>, vector<8x128xf32>,
    } else {
    }
    %c0_2 = arith.constant 0 : index
    %c0_3 = arith.constant 0 : index
    %25 = vector.load %arg11[%c0_2, %c0_3] : memref<8x128xf32, #tpu.memory_space<vmem>>, vector<8x128xf32>
    %26 = arith.truncf %21 : vector<8x256xf32> to vector<8x256xbf16>
    %c0_4 = arith.constant 0 : index
    %c0_5 = arith.constant 0 : index
    %27 = vector.load %arg3[%c0_4, %c0_5] : memref<256x128xbf16, #tpu.memory_space<vmem>>, vector<256x128xbf16>
    %cst_6 = arith.constant dense<0.000000e+00> : vector<8x128xf32>
    %28 = tpu.matmul %26, %27, %cst_6 {dimension_numbers = #tpu.dot_dimension_numbers<[1], [0], [0], [1], [0, 0, 1, 1], [], []>} : vector<8x256xbf16>, vector<256x128xbf16>, vector<8x128xf32> -> vector<8x128xf32>
    %29 = arith.addf %25, %28 : vector<8x128xf32>
    %c0_7 = arith.constant 0 : index
    %c0_8 = arith.constant 0 : index
    %30 = vector.load %arg11[%c0_7, %c0_8] : memref<8x128xf32, #tpu.memory_space<vmem>>, vector<8x128xf32>
    tpu.vector_store %arg11[%c0_7, %c0_8], %29 {strides = array<i32>} : memref<8x128xf32, #tpu.memory_space<vmem>>, vector<8x128xf32>,
    %c0_i32_9 = arith.constant 0 : i32
    %31 = arith.cmpi eq, %arg1, %c0_i32_9 : i32
    %32 = arith.extui %31 : i1 to i32
    %c0_i32_10 = arith.constant 0 : i32
    %33 = arith.cmpi ne, %32, %c0_i32_10 : i32
    scf.if %33 {
      %cst_11 = arith.constant dense<0.000000e+00> : vector<8xf32>
      %34 = vector.multi_reduction <add>, %10, %cst_11 [1] : vector<8x128xf32> to vector<8xf32>
      %35 = vector.shape_cast %34 : vector<8xf32> to vector<8x1xf32>
      %cst_12 = arith.constant 1.000000e+00 : f32
      %36 = vector.broadcast %cst_12 : f32 to vector<8x1xf32>
      %37 = arith.maximumf %35, %36 : vector<8x1xf32>
      %38 = tpu.reciprocal %37 {approx = true} : vector<8x1xf32> -> vector<8x1xf32>
      %c0_13 = arith.constant 0 : index
      %c0_14 = arith.constant 0 : index
      %39 = vector.load %arg11[%c0_13, %c0_14] : memref<8x128xf32, #tpu.memory_space<vmem>>, vector<8x128xf32>
      %40 = vector.broadcast %38 : vector<8x1xf32> to vector<8x128xf32>
      %41 = arith.mulf %39, %40 : vector<8x128xf32>
      %c0_15 = arith.constant 0 : index
      %c0_16 = arith.constant 0 : index
      %42 = vector.load %arg4[%c0_15, %c0_16] : memref<128x128xbf16, #tpu.memory_space<vmem>>, vector<128x128xbf16>
      %c0_17 = arith.constant 0 : index
      %c0_18 = arith.constant 0 : index
      %43 = vector.load %arg5[%c0_17, %c0_18] : memref<8x128xf32, #tpu.memory_space<vmem>>, vector<8x128xf32>
      %44 = arith.truncf %41 : vector<8x128xf32> to vector<8x128xbf16>
      %cst_19 = arith.constant dense<0.000000e+00> : vector<8x128xf32>
      %45 = tpu.matmul %44, %42, %cst_19 {dimension_numbers = #tpu.dot_dimension_numbers<[1], [0], [0], [1], [0, 0, 1, 1], [], []>} : vector<8x128xbf16>, vector<128x128xbf16>, vector<8x128xf32> -> vector<8x128xf32>
      %46 = arith.addf %45, %43 : vector<8x128xf32>
      %cst_20 = arith.constant 0.000000e+00 : f32
      %47 = vector.broadcast %cst_20 : f32 to vector<8x128xf32>
      %48 = arith.maximumf %46, %47 : vector<8x128xf32>
      %c0_21 = arith.constant 0 : index
      %c0_22 = arith.constant 0 : index
      %49 = vector.load %arg6[%c0_21, %c0_22] : memref<128x128xbf16, #tpu.memory_space<vmem>>, vector<128x128xbf16>
      %c0_23 = arith.constant 0 : index
      %c0_24 = arith.constant 0 : index
      %50 = vector.load %arg7[%c0_23, %c0_24] : memref<8x128xf32, #tpu.memory_space<vmem>>, vector<8x128xf32>
      %51 = arith.truncf %48 : vector<8x128xf32> to vector<8x128xbf16>
      %cst_25 = arith.constant dense<0.000000e+00> : vector<8x128xf32>
      %52 = tpu.matmul %51, %49, %cst_25 {dimension_numbers = #tpu.dot_dimension_numbers<[1], [0], [0], [1], [0, 0, 1, 1], [], []>} : vector<8x128xbf16>, vector<128x128xbf16>, vector<8x128xf32> -> vector<8x128xf32>
      %53 = arith.addf %52, %50 : vector<8x128xf32>
      %cst_26 = arith.constant 0.000000e+00 : f32
      %54 = vector.broadcast %cst_26 : f32 to vector<8x128xf32>
      %55 = arith.maximumf %53, %54 : vector<8x128xf32>
      %c0_27 = arith.constant 0 : index
      %c0_28 = arith.constant 0 : index
      %56 = vector.load %arg8[%c0_27, %c0_28] : memref<128x128xbf16, #tpu.memory_space<vmem>>, vector<128x128xbf16>
      %c0_29 = arith.constant 0 : index
      %c0_30 = arith.constant 0 : index
      %57 = vector.load %arg9[%c0_29, %c0_30] : memref<8x128xf32, #tpu.memory_space<vmem>>, vector<8x128xf32>
      %58 = arith.truncf %55 : vector<8x128xf32> to vector<8x128xbf16>
      %cst_31 = arith.constant dense<0.000000e+00> : vector<8x128xf32>
      %59 = tpu.matmul %58, %56, %cst_31 {dimension_numbers = #tpu.dot_dimension_numbers<[1], [0], [0], [1], [0, 0, 1, 1], [], []>} : vector<8x128xbf16>, vector<128x128xbf16>, vector<8x128xf32> -> vector<8x128xf32>
      %60 = arith.addf %59, %57 : vector<8x128xf32>
      %c0_32 = arith.constant 0 : index
      %c0_33 = arith.constant 0 : index
      %61 = vector.load %arg10[%c0_32, %c0_33] : memref<8x128xf32, #tpu.memory_space<vmem>>, vector<8x128xf32>
      tpu.vector_store %arg10[%c0_32, %c0_33], %60 {strides = array<i32>} : memref<8x128xf32, #tpu.memory_space<vmem>>, vector<8x128xf32>,
    } else {
    }
    return
  }
  func.func @transform_0(%arg0: i32, %arg1: i32) -> (i32, i32) {
    %c0_i32 = arith.constant 0 : i32
    %c0_i32_0 = arith.constant 0 : i32
    %c0_i32_1 = arith.constant 0 : i32
    return %c0_i32, %c0_i32_0 : i32, i32
  }
  func.func @transform_1(%arg0: i32, %arg1: i32) -> (i32, i32) {
    %c0_i32 = arith.constant 0 : i32
    %c0_i32_0 = arith.constant 0 : i32
    return %arg1, %c0_i32 : i32, i32
  }
  func.func @transform_2(%arg0: i32, %arg1: i32) -> (i32, i32) {
    %c0_i32 = arith.constant 0 : i32
    %c0_i32_0 = arith.constant 0 : i32
    %c0_i32_1 = arith.constant 0 : i32
    return %c0_i32, %c0_i32_0 : i32, i32
  }
  func.func @transform_3(%arg0: i32, %arg1: i32) -> (i32, i32) {
    %c0_i32 = arith.constant 0 : i32
    %c0_i32_0 = arith.constant 0 : i32
    %c0_i32_1 = arith.constant 0 : i32
    return %c0_i32, %c0_i32_0 : i32, i32
  }
  func.func @transform_4(%arg0: i32, %arg1: i32) -> (i32, i32) {
    %c0_i32 = arith.constant 0 : i32
    %c0_i32_0 = arith.constant 0 : i32
    %c0_i32_1 = arith.constant 0 : i32
    return %c0_i32, %c0_i32_0 : i32, i32
  }
  func.func @transform_5(%arg0: i32, %arg1: i32) -> (i32, i32) {
    %c0_i32 = arith.constant 0 : i32
    %c0_i32_0 = arith.constant 0 : i32
    %c0_i32_1 = arith.constant 0 : i32
    return %c0_i32, %c0_i32_0 : i32, i32
  }
  func.func @transform_6(%arg0: i32, %arg1: i32) -> (i32, i32) {
    %c0_i32 = arith.constant 0 : i32
    %c0_i32_0 = arith.constant 0 : i32
    %c0_i32_1 = arith.constant 0 : i32
    return %c0_i32, %c0_i32_0 : i32, i32
  }
  func.func @transform_7(%arg0: i32, %arg1: i32) -> (i32, i32) {
    %c0_i32 = arith.constant 0 : i32
    %c0_i32_0 = arith.constant 0 : i32
    %c0_i32_1 = arith.constant 0 : i32
    return %c0_i32, %c0_i32_0 : i32, i32
  }
  func.func @transform_8(%arg0: i32, %arg1: i32) -> (i32, i32) {
    %c0_i32 = arith.constant 0 : i32
    %c0_i32_0 = arith.constant 0 : i32
    return %arg0, %c0_i32 : i32, i32
  }
}

</mosaic_0001>

<llo_original>
// kernel: tpu_custom_call.1
$region0: #{tpu_custom_call.1}
  #allocation0 [shape = 'u32[]', space=smem, size = 0x4, offset = 0x4, fixed_abs, tag = 'smem constant byte address 0x4 - core index']
  #allocation1 [shape = 'u32[144,128]{1,0:T(1,128)}', space=vmem, size = 0x12000, scoped, tag = 'internal scratch']
  #allocation2 [shape = 'f32[8,128]{1,0:T(8,128)}', space=vmem, size = 0x1000, scoped, tag = 'scratch operand']
  %s0 = inlined_call_operand.hbm [shape: s32[8,128], index: 0, kind: input, shape index: {}]
  %s1 = inlined_call_operand.hbm [shape: bf16[256,128], index: 1, kind: input, shape index: {}]
  %s2 = inlined_call_operand.hbm [shape: bf16[128,128], index: 2, kind: input, shape index: {}]
  %s3 = inlined_call_operand.hbm [shape: f32[8,128], index: 3, kind: input, shape index: {}]
  %s4 = inlined_call_operand.hbm [shape: bf16[128,128], index: 4, kind: input, shape index: {}]
  %s5 = inlined_call_operand.vmem [shape: f32[8,128], index: 5, kind: input, shape index: {}]
  %s6 = inlined_call_operand.hbm [shape: bf16[128,128], index: 6, kind: input, shape index: {}]
  %s7 = inlined_call_operand.hbm [shape: f32[8,128], index: 7, kind: input, shape index: {}]
  %s8 = inlined_call_operand.hbm [shape: f32[8,128], index: 8, kind: output, shape index: {}]
  %s9 = sld [smem:[#allocation0]]
  $region78: #{tpu_custom_call.1} parent=0
    _
  %s11 = ssub.s32 1, %s9
  %s12 = scalar_select 0, %s11, %s9
  $region1: #{tpu_custom_call.1} parent=0
    #allocation3 [shape = 'u8[4096]{0}', space=vmem, size = 0x1000, scoped, tag = 'input window, operand 0, single buffered']
    #allocation4 [shape = 's32[1]{0}', space=sflag, size = 0x4, scoped, tag = 'scoped memory for tpu_custom_call.1']
    #allocation5 [shape = 's32[1]{0}', space=sflag, size = 0x4, scoped, tag = 'scoped memory for tpu_custom_call.1']
    #allocation6 [shape = 'u8[65536]{0}', space=vmem, size = 0x10000, scoped, tag = 'input window, operand 1, single buffered']
    #allocation7 [shape = 's32[1]{0}', space=sflag, size = 0x4, scoped, tag = 'scoped memory for tpu_custom_call.1']
    #allocation8 [shape = 'u8[32768]{0}', space=vmem, size = 0x8000, scoped, tag = 'input window, operand 2, single buffered']
    #allocation9 [shape = 'u8[4096]{0}', space=vmem, size = 0x1000, scoped, tag = 'input window, operand 3, single buffered']
    #allocation10 [shape = 's32[1]{0}', space=sflag, size = 0x4, scoped, tag = 'scoped memory for tpu_custom_call.1']
    #allocation11 [shape = 'u8[32768]{0}', space=vmem, size = 0x8000, scoped, tag = 'input window, operand 4, single buffered']
    #allocation12 [shape = 'u8[32768]{0}', space=vmem, size = 0x8000, scoped, tag = 'input window, operand 6, single buffered']
    #allocation13 [shape = 's32[1]{0}', space=sflag, size = 0x4, scoped, tag = 'scoped memory for tpu_custom_call.1']
    #allocation14 [shape = 'u8[4096]{0}', space=vmem, size = 0x1000, scoped, tag = 'input window, operand 7, single buffered']
    #allocation15 [shape = 'u8[4096]{0}', space=vmem, size = 0x1000, scoped, tag = 'output window, operand 0, single buffered']
    %13 = vsyncpa [#allocation4], 0
    %14 = vsyncpa [#allocation7], 0
    %15 = vsyncpa [#allocation10], 0
    %16 = vsyncpa [#allocation13], 0
    %17 = vsyncpa [#allocation5], 0
    // Predicated region
    $region2: #{tpu_custom_call.1} parent=1 // pred_check
      _
    $region3: #{tpu_custom_call.1} parent=1 // pred_check_branch
      %19 = sbr.rel (0) target = $region5
    $region4: #{tpu_custom_call.1} parent=1 // pred_region
      %s21 = ssub.s32 128, 128
      %22 = vsyncadd [#allocation4], %s21
      %s24 = sshll.u32 [#allocation3], 4
      %s25 = int_to_ptr.vmem [resolvable:$true] %s24
      %27 = dma.hbm_to_vmem [thread:$0]  %s0, 128, %s25, [#allocation4]
    $region5: #{tpu_custom_call.1} parent=1 // pred_fallthru
      _
    // Predicated region
    $region6: #{tpu_custom_call.1} parent=1 // pred_check
      _
    $region7: #{tpu_custom_call.1} parent=1 // pred_check_branch
      %29 = sbr.rel (0) target = $region9
    $region8: #{tpu_custom_call.1} parent=1 // pred_region
      %s31 = ssub.s32 2048, 2048
      %32 = vsyncadd [#allocation7], %s31
      %s33 = sshll.u32 [#allocation6], 4
      %s34 = int_to_ptr.vmem [resolvable:$true] %s33
      %39 = dma.hbm_to_vmem [thread:$0]  %s1, 2048, %s34, [#allocation7], 64, 64, 4
    $region9: #{tpu_custom_call.1} parent=1 // pred_fallthru
      _
    // Predicated region
    $region10: #{tpu_custom_call.1} parent=1 // pred_check
      _
    $region11: #{tpu_custom_call.1} parent=1 // pred_check_branch
      %41 = sbr.rel (0) target = $region13
    $region12: #{tpu_custom_call.1} parent=1 // pred_region
      %s43 = ssub.s32 1024, 1024
      %44 = vsyncadd [#allocation7], %s43
      %s45 = sshll.u32 [#allocation8], 4
      %s46 = int_to_ptr.vmem [resolvable:$true] %s45
      %51 = dma.hbm_to_vmem [thread:$0]  %s2, 1024, %s46, [#allocation7], 64, 64, 4
    $region13: #{tpu_custom_call.1} parent=1 // pred_fallthru
      _
    // Predicated region
    $region14: #{tpu_custom_call.1} parent=1 // pred_check
      _
    $region15: #{tpu_custom_call.1} parent=1 // pred_check_branch
      %53 = sbr.rel (0) target = $region17
    $region16: #{tpu_custom_call.1} parent=1 // pred_region
      %s55 = ssub.s32 128, 128
      %56 = vsyncadd [#allocation10], %s55
      %s58 = sshll.u32 [#allocation9], 4
      %s59 = int_to_ptr.vmem [resolvable:$true] %s58
      %61 = dma.hbm_to_vmem [thread:$0]  %s3, 128, %s59, [#allocation10]
    $region17: #{tpu_custom_call.1} parent=1 // pred_fallthru
      _
    // Predicated region
    $region18: #{tpu_custom_call.1} parent=1 // pred_check
      _
    $region19: #{tpu_custom_call.1} parent=1 // pred_check_branch
      %63 = sbr.rel (0) target = $region21
    $region20: #{tpu_custom_call.1} parent=1 // pred_region
      %s65 = ssub.s32 1024, 1024
      %66 = vsyncadd [#allocation10], %s65
      %s67 = sshll.u32 [#allocation11], 4
      %s68 = int_to_ptr.vmem [resolvable:$true] %s67
      %73 = dma.hbm_to_vmem [thread:$0]  %s4, 1024, %s68, [#allocation10], 64, 64, 4
    $region21: #{tpu_custom_call.1} parent=1 // pred_fallthru
      _
    // Predicated region
    $region22: #{tpu_custom_call.1} parent=1 // pred_check
      _
    $region23: #{tpu_custom_call.1} parent=1 // pred_check_branch
      %75 = sbr.rel (0) target = $region25
    $region24: #{tpu_custom_call.1} parent=1 // pred_region
      _
    $region25: #{tpu_custom_call.1} parent=1 // pred_fallthru
      _
    // Predicated region
    $region26: #{tpu_custom_call.1} parent=1 // pred_check
      _
    $region27: #{tpu_custom_call.1} parent=1 // pred_check_branch
      %77 = sbr.rel (0) target = $region29
    $region28: #{tpu_custom_call.1} parent=1 // pred_region
      %s79 = ssub.s32 1024, 1024
      %80 = vsyncadd [#allocation13], %s79
      %s81 = sshll.u32 [#allocation12], 4
      %s82 = int_to_ptr.vmem [resolvable:$true] %s81
      %87 = dma.hbm_to_vmem [thread:$0]  %s6, 1024, %s82, [#allocation13], 64, 64, 4
    $region29: #{tpu_custom_call.1} parent=1 // pred_fallthru
      _
    // Predicated region
    $region30: #{tpu_custom_call.1} parent=1 // pred_check
      _
    $region31: #{tpu_custom_call.1} parent=1 // pred_check_branch
      %89 = sbr.rel (0) target = $region33
    $region32: #{tpu_custom_call.1} parent=1 // pred_region
      %s91 = ssub.s32 128, 128
      %92 = vsyncadd [#allocation13], %s91
      %s94 = sshll.u32 [#allocation14], 4
      %s95 = int_to_ptr.vmem [resolvable:$true] %s94
      %97 = dma.hbm_to_vmem [thread:$0]  %s7, 128, %s95, [#allocation13]
    $region33: #{tpu_custom_call.1} parent=1 // pred_fallthru
      _
    // Predicated region
    $region34: #{tpu_custom_call.1} parent=1 // pred_check
      _
    $region35: #{tpu_custom_call.1} parent=1 // pred_check_branch
      %99 = sbr.rel (0) target = $region37
    $region36: #{tpu_custom_call.1} parent=1 // pred_region
      %100 = dma.done [#allocation4], 128
    $region37: #{tpu_custom_call.1} parent=1 // pred_fallthru
      _
    // Predicated region
    $region38: #{tpu_custom_call.1} parent=1 // pred_check
      _
    $region39: #{tpu_custom_call.1} parent=1 // pred_check_branch
      %102 = sbr.rel (0) target = $region41
    $region40: #{tpu_custom_call.1} parent=1 // pred_region
      %103 = dma.done [#allocation7], 2048
    $region41: #{tpu_custom_call.1} parent=1 // pred_fallthru
      _
    // Predicated region
    $region42: #{tpu_custom_call.1} parent=1 // pred_check
      _
    $region43: #{tpu_custom_call.1} parent=1 // pred_check_branch
      %105 = sbr.rel (0) target = $region45
    $region44: #{tpu_custom_call.1} parent=1 // pred_region
      %106 = dma.done [#allocation7], 1024
    $region45: #{tpu_custom_call.1} parent=1 // pred_fallthru
      _
    // Predicated region
    $region46: #{tpu_custom_call.1} parent=1 // pred_check
      _
    $region47: #{tpu_custom_call.1} parent=1 // pred_check_branch
      %108 = sbr.rel (0) target = $region49
    $region48: #{tpu_custom_call.1} parent=1 // pred_region
      %109 = dma.done [#allocation10], 128
    $region49: #{tpu_custom_call.1} parent=1 // pred_fallthru
      _
    // Predicated region
    $region50: #{tpu_custom_call.1} parent=1 // pred_check
      _
    $region51: #{tpu_custom_call.1} parent=1 // pred_check_branch
      %111 = sbr.rel (0) target = $region53
    $region52: #{tpu_custom_call.1} parent=1 // pred_region
      %112 = dma.done [#allocation10], 1024
    $region53: #{tpu_custom_call.1} parent=1 // pred_fallthru
      _
    // Predicated region
    $region54: #{tpu_custom_call.1} parent=1 // pred_check
      _
    $region55: #{tpu_custom_call.1} parent=1 // pred_check_branch
      %114 = sbr.rel (0) target = $region57
    $region56: #{tpu_custom_call.1} parent=1 // pred_region
      %115 = dma.done [#allocation13], 1024
    $region57: #{tpu_custom_call.1} parent=1 // pred_fallthru
      _
    // Predicated region
    $region58: #{tpu_custom_call.1} parent=1 // pred_check
      _
    $region59: #{tpu_custom_call.1} parent=1 // pred_check_branch
      %117 = sbr.rel (0) target = $region61
    $region60: #{tpu_custom_call.1} parent=1 // pred_region
      %118 = dma.done [#allocation13], 128
    $region61: #{tpu_custom_call.1} parent=1 // pred_fallthru
      _
    %v120 = vld [vmem:[#allocation3] sm:$0xff]
    %v121 = vlaneseq
    %v122 = vshrl.u32 %v121, 7
    %s123 = smul.u32 0, 8
    %v124 = vstv %s123
    %v125 = vadd.s32 %v122, %v124
    %v126 = vlaneseq
    %v127 = vshrl.u32 %v126, 7
    %v128 = vsub.s32 1, %v127
    %v129 = vrot.slane %v120, %v128
    %vm130 = vcmp.eq.s32.totalorder %v129, %v125
    %v131 = vsel %vm130, 1, 0
    %v132 = vcvt.s32.f32 %v131
    %v133 = vadd.s32 %v122, 8
    %v134 = vadd.s32 %v122, 16
    %v135 = vadd.s32 %v122, 24
    %v136 = vadd.s32 %v122, 32
    %v137 = vadd.s32 %v122, 40
    %v138 = vadd.s32 %v122, 48
    %v139 = vadd.s32 %v122, 56
    %v140 = vadd.s32 %v122, 64
    %v141 = vadd.s32 %v122, 72
    %v142 = vadd.s32 %v122, 80
    %v143 = vadd.s32 %v122, 88
    %v144 = vadd.s32 %v122, 96
    %v145 = vadd.s32 %v122, 104
    %v146 = vadd.s32 %v122, 112
    %v147 = vadd.s32 %v122, 120
    %v148 = vadd.s32 %v122, 128
    %v149 = vadd.s32 %v122, 136
    %v150 = vadd.s32 %v122, 144
    %v151 = vadd.s32 %v122, 152
    %v152 = vadd.s32 %v122, 160
    %v153 = vadd.s32 %v122, 168
    %v154 = vadd.s32 %v122, 176
    %v155 = vadd.s32 %v122, 184
    %v156 = vadd.s32 %v122, 192
    %v157 = vadd.s32 %v122, 200
    %v158 = vadd.s32 %v122, 208
    %v159 = vadd.s32 %v122, 216
    %v160 = vadd.s32 %v122, 224
    %v161 = vadd.s32 %v122, 232
    %v162 = vadd.s32 %v122, 240
    %v163 = vadd.s32 %v122, 248
    %s164 = smul.u32 0, 256
    %v165 = vstv %s164
    %v166 = vadd.s32 %v122, %v165
    %v167 = vadd.s32 %v133, %v165
    %v168 = vadd.s32 %v134, %v165
    %v169 = vadd.s32 %v135, %v165
    %v170 = vadd.s32 %v136, %v165
    %v171 = vadd.s32 %v137, %v165
    %v172 = vadd.s32 %v138, %v165
    %v173 = vadd.s32 %v139, %v165
    %v174 = vadd.s32 %v140, %v165
    %v175 = vadd.s32 %v141, %v165
    %v176 = vadd.s32 %v142, %v165
    %v177 = vadd.s32 %v143, %v165
    %v178 = vadd.s32 %v144, %v165
    %v179 = vadd.s32 %v145, %v165
    %v180 = vadd.s32 %v146, %v165
    %v181 = vadd.s32 %v147, %v165
    %v182 = vadd.s32 %v148, %v165
    %v183 = vadd.s32 %v149, %v165
    %v184 = vadd.s32 %v150, %v165
    %v185 = vadd.s32 %v151, %v165
    %v186 = vadd.s32 %v152, %v165
    %v187 = vadd.s32 %v153, %v165
    %v188 = vadd.s32 %v154, %v165
    %v189 = vadd.s32 %v155, %v165
    %v190 = vadd.s32 %v156, %v165
    %v191 = vadd.s32 %v157, %v165
    %v192 = vadd.s32 %v158, %v165
    %v193 = vadd.s32 %v159, %v165
    %v194 = vadd.s32 %v160, %v165
    %v195 = vadd.s32 %v161, %v165
    %v196 = vadd.s32 %v162, %v165
    %v197 = vadd.s32 %v163, %v165
    %v198 = vlaneseq
    %v199 = vshrl.u32 %v198, 7
    %v200 = vsub.s32 0, %v199
    %v201 = vrot.slane %v120, %v200
    %vm202 = vcmp.eq.s32.totalorder %v201, %v166
    %vm203 = vcmp.eq.s32.totalorder %v201, %v167
    %vm204 = vcmp.eq.s32.totalorder %v201, %v168
    %vm205 = vcmp.eq.s32.totalorder %v201, %v169
    %vm206 = vcmp.eq.s32.totalorder %v201, %v170
    %vm207 = vcmp.eq.s32.totalorder %v201, %v171
    %vm208 = vcmp.eq.s32.totalorder %v201, %v172
    %vm209 = vcmp.eq.s32.totalorder %v201, %v173
    %vm210 = vcmp.eq.s32.totalorder %v201, %v174
    %vm211 = vcmp.eq.s32.totalorder %v201, %v175
    %vm212 = vcmp.eq.s32.totalorder %v201, %v176
    %vm213 = vcmp.eq.s32.totalorder %v201, %v177
    %vm214 = vcmp.eq.s32.totalorder %v201, %v178
    %vm215 = vcmp.eq.s32.totalorder %v201, %v179
    %vm216 = vcmp.eq.s32.totalorder %v201, %v180
    %vm217 = vcmp.eq.s32.totalorder %v201, %v181
    %vm218 = vcmp.eq.s32.totalorder %v201, %v182
    %vm219 = vcmp.eq.s32.totalorder %v201, %v183
    %vm220 = vcmp.eq.s32.totalorder %v201, %v184
    %vm221 = vcmp.eq.s32.totalorder %v201, %v185
    %vm222 = vcmp.eq.s32.totalorder %v201, %v186
    %vm223 = vcmp.eq.s32.totalorder %v201, %v187
    %vm224 = vcmp.eq.s32.totalorder %v201, %v188
    %vm225 = vcmp.eq.s32.totalorder %v201, %v189
    %vm226 = vcmp.eq.s32.totalorder %v201, %v190
    %vm227 = vcmp.eq.s32.totalorder %v201, %v191
    %vm228 = vcmp.eq.s32.totalorder %v201, %v192
    %vm229 = vcmp.eq.s32.totalorder %v201, %v193
    %vm230 = vcmp.eq.s32.totalorder %v201, %v194
    %vm231 = vcmp.eq.s32.totalorder %v201, %v195
    %vm232 = vcmp.eq.s32.totalorder %v201, %v196
    %vm233 = vcmp.eq.s32.totalorder %v201, %v197
    %v234 = vsel %vm202, 1, 0
    %v235 = vsel %vm203, 1, 0
    %v236 = vsel %vm204, 1, 0
    %v237 = vsel %vm205, 1, 0
    %v238 = vsel %vm206, 1, 0
    %v239 = vsel %vm207, 1, 0
    %v240 = vsel %vm208, 1, 0
    %v241 = vsel %vm209, 1, 0
    %v242 = vsel %vm210, 1, 0
    %v243 = vsel %vm211, 1, 0
    %v244 = vsel %vm212, 1, 0
    %v245 = vsel %vm213, 1, 0
    %v246 = vsel %vm214, 1, 0
    %v247 = vsel %vm215, 1, 0
    %v248 = vsel %vm216, 1, 0
    %v249 = vsel %vm217, 1, 0
    %v250 = vsel %vm218, 1, 0
    %v251 = vsel %vm219, 1, 0
    %v252 = vsel %vm220, 1, 0
    %v253 = vsel %vm221, 1, 0
    %v254 = vsel %vm222, 1, 0
    %v255 = vsel %vm223, 1, 0
    %v256 = vsel %vm224, 1, 0
    %v257 = vsel %vm225, 1, 0
    %v258 = vsel %vm226, 1, 0
    %v259 = vsel %vm227, 1, 0
    %v260 = vsel %vm228, 1, 0
    %v261 = vsel %vm229, 1, 0
    %v262 = vsel %vm230, 1, 0
    %v263 = vsel %vm231, 1, 0
    %v264 = vsel %vm232, 1, 0
    %v265 = vsel %vm233, 1, 0
    %v266 = vcvt.s32.f32 %v234
    %v267 = vcvt.s32.f32 %v235
    %v268 = vcvt.s32.f32 %v236
    %v269 = vcvt.s32.f32 %v237
    %v270 = vcvt.s32.f32 %v238
    %v271 = vcvt.s32.f32 %v239
    %v272 = vcvt.s32.f32 %v240
    %v273 = vcvt.s32.f32 %v241
    %v274 = vcvt.s32.f32 %v242
    %v275 = vcvt.s32.f32 %v243
    %v276 = vcvt.s32.f32 %v244
    %v277 = vcvt.s32.f32 %v245
    %v278 = vcvt.s32.f32 %v246
    %v279 = vcvt.s32.f32 %v247
    %v280 = vcvt.s32.f32 %v248
    %v281 = vcvt.s32.f32 %v249
    %v282 = vcvt.s32.f32 %v250
    %v283 = vcvt.s32.f32 %v251
    %v284 = vcvt.s32.f32 %v252
    %v285 = vcvt.s32.f32 %v253
    %v286 = vcvt.s32.f32 %v254
    %v287 = vcvt.s32.f32 %v255
    %v288 = vcvt.s32.f32 %v256
    %v289 = vcvt.s32.f32 %v257
    %v290 = vcvt.s32.f32 %v258
    %v291 = vcvt.s32.f32 %v259
    %v292 = vcvt.s32.f32 %v260
    %v293 = vcvt.s32.f32 %v261
    %v294 = vcvt.s32.f32 %v262
    %v295 = vcvt.s32.f32 %v263
    %v296 = vcvt.s32.f32 %v264
    %v297 = vcvt.s32.f32 %v265
    %v298 = vpack.c.bf16 %v267, %v266
    %v299 = vpack.c.bf16 %v269, %v268
    %v300 = vpack.c.bf16 %v271, %v270
    %v301 = vpack.c.bf16 %v273, %v272
    %v302 = vpack.c.bf16 %v275, %v274
    %v303 = vpack.c.bf16 %v277, %v276
    %v304 = vpack.c.bf16 %v279, %v278
    %v305 = vpack.c.bf16 %v281, %v280
    %v306 = vpack.c.bf16 %v283, %v282
    %v307 = vpack.c.bf16 %v285, %v284
    %v308 = vpack.c.bf16 %v287, %v286
    %v309 = vpack.c.bf16 %v289, %v288
    %v310 = vpack.c.bf16 %v291, %v290
    %v311 = vpack.c.bf16 %v293, %v292
    %v312 = vpack.c.bf16 %v295, %v294
    %v313 = vpack.c.bf16 %v297, %v296
    %v314 = vpack.c.bf16 %v132, %v132
    %315 = vmatprep.subr.bf16.mxu0 0
    %316 = vmatpush1.bf16.xpose.msra.mxu0 %v305
    %317 = vmatprep.subr.bf16.mxu0 0
    %318 = vmatpush1.bf16.xpose.msra.mxu0 %v304
    %319 = vmatprep.subr.bf16.mxu0 0
    %320 = vmatpush1.bf16.xpose.msra.mxu0 %v303
    %321 = vmatprep.subr.bf16.mxu0 0
    %322 = vmatpush1.bf16.xpose.msra.mxu0 %v302
    %323 = vmatprep.subr.bf16.mxu0 0
    %324 = vmatpush1.bf16.xpose.msra.mxu0 %v301
    %325 = vmatprep.subr.bf16.mxu0 0
    %326 = vmatpush1.bf16.xpose.msra.mxu0 %v300
    %327 = vmatprep.subr.bf16.mxu0 0
    %328 = vmatpush1.bf16.xpose.msra.mxu0 %v299
    %329 = vmatprep.subr.bf16.mxu0 0
    %330 = vmatpush1.bf16.xpose.msra.mxu0 %v298
    %331 = vmatprep.subr.bf16.mxu0 0
    %332 = vmatpush2.bf16.xpose.msra.mxu0 %v313
    %333 = vmatprep.subr.bf16.mxu0 0
    %334 = vmatpush2.bf16.xpose.msra.mxu0 %v312
    %335 = vmatprep.subr.bf16.mxu0 0
    %336 = vmatpush2.bf16.xpose.msra.mxu0 %v311
    %337 = vmatprep.subr.bf16.mxu0 0
    %338 = vmatpush2.bf16.xpose.msra.mxu0 %v310
    %339 = vmatprep.subr.bf16.mxu0 0
    %340 = vmatpush2.bf16.xpose.msra.mxu0 %v309
    %341 = vmatprep.subr.bf16.mxu0 0
    %342 = vmatpush2.bf16.xpose.msra.mxu0 %v308
    %343 = vmatprep.subr.bf16.mxu0 0
    %344 = vmatpush2.bf16.xpose.msra.mxu0 %v307
    %345 = vmatprep.subr.bf16.mxu0 0
    %346 = vmatpush2.bf16.xpose.msra.mxu0 %v306
    %347 = vmatprep.mubr.bf16.mxu0 0
    %348 = vmatmul.mubr.bf16.gmra.mxu0 %v314
    %v349 = vpop.f32.mrf.mxu0
    %v350 = vadd.f32 0.0, %v349
    %v351 = vpop.f32.mrf.mxu0
    %v352 = vadd.f32 0.0, %v351
    %v353 = vpop.f32.mrf.mxu0
    %v354 = vpop.f32.mrf.mxu0
    %355 = vdwg.mxu0
    %p356 = scmp.eq.s32.totalorder 0, 0
    // Predicated region
    $region62: #{tpu_custom_call.1} parent=1 // pred_check
      %p357 = pneg %p356
    $region63: #{tpu_custom_call.1} parent=1 // pred_check_branch
      %359 = sbr.rel (%p357) target = $region65
    $region64: #{tpu_custom_call.1} parent=1 // pred_region
      %360 = vst [vmem:[#allocation2] sm:$0xff] 0.0
    $region65: #{tpu_custom_call.1} parent=1 // pred_fallthru
      _
    %v361 = vld [vmem:[#allocation2] sm:$0xff]
    %v362 = vpack.c.bf16 %v350, %v350
    %v363 = vpack.c.bf16 %v352, %v352
    %v364 = vld [vmem:[#allocation6] sm:$0xf]
    %v365 = vld [vmem:[#allocation6 + $0x4] sm:$0xf]
    %v366 = vld [vmem:[#allocation6 + $0x8] sm:$0xf]
    %v367 = vld [vmem:[#allocation6 + $0xc] sm:$0xf]
    %v368 = vld [vmem:[#allocation6 + $0x10] sm:$0xf]
    %v369 = vld [vmem:[#allocation6 + $0x14] sm:$0xf]
    %v370 = vld [vmem:[#allocation6 + $0x18] sm:$0xf]
    %v371 = vld [vmem:[#allocation6 + $0x1c] sm:$0xf]
    %v372 = vld [vmem:[#allocation6 + $0x20] sm:$0xf]
    %v373 = vld [vmem:[#allocation6 + $0x24] sm:$0xf]
    %v374 = vld [vmem:[#allocation6 + $0x28] sm:$0xf]
    %v375 = vld [vmem:[#allocation6 + $0x2c] sm:$0xf]
    %v376 = vld [vmem:[#allocation6 + $0x30] sm:$0xf]
    %v377 = vld [vmem:[#allocation6 + $0x34] sm:$0xf]
    %v378 = vld [vmem:[#allocation6 + $0x38] sm:$0xf]
    %v379 = vld [vmem:[#allocation6 + $0x3c] sm:$0xf]
    %v380 = vld [vmem:[#allocation6 + $0x40] sm:$0xf]
    %v381 = vld [vmem:[#allocation6 + $0x44] sm:$0xf]
    %v382 = vld [vmem:[#allocation6 + $0x48] sm:$0xf]
    %v383 = vld [vmem:[#allocation6 + $0x4c] sm:$0xf]
    %v384 = vld [vmem:[#allocation6 + $0x50] sm:$0xf]
    %v385 = vld [vmem:[#allocation6 + $0x54] sm:$0xf]
    %v386 = vld [vmem:[#allocation6 + $0x58] sm:$0xf]
    %v387 = vld [vmem:[#allocation6 + $0x5c] sm:$0xf]
    %v388 = vld [vmem:[#allocation6 + $0x60] sm:$0xf]
    %v389 = vld [vmem:[#allocation6 + $0x64] sm:$0xf]
    %v390 = vld [vmem:[#allocation6 + $0x68] sm:$0xf]
    %v391 = vld [vmem:[#allocation6 + $0x6c] sm:$0xf]
    %v392 = vld [vmem:[#allocation6 + $0x70] sm:$0xf]
    %v393 = vld [vmem:[#allocation6 + $0x74] sm:$0xf]
    %v394 = vld [vmem:[#allocation6 + $0x78] sm:$0xf]
    %v395 = vld [vmem:[#allocation6 + $0x7c] sm:$0xf]
    %v428 = vunpack.c.l.b16 %v364
    %v429 = vunpack.c.l.b16 %v365
    %v430 = vunpack.c.l.b16 %v366
    %v431 = vunpack.c.l.b16 %v367
    %v432 = vunpack.c.l.b16 %v368
    %v433 = vunpack.c.l.b16 %v369
    %v434 = vunpack.c.l.b16 %v370
    %v435 = vunpack.c.l.b16 %v371
    %v436 = vunpack.c.l.b16 %v372
    %v437 = vunpack.c.l.b16 %v373
    %v438 = vunpack.c.l.b16 %v374
    %v439 = vunpack.c.l.b16 %v375
    %v440 = vunpack.c.l.b16 %v376
    %v441 = vunpack.c.l.b16 %v377
    %v442 = vunpack.c.l.b16 %v378
    %v443 = vunpack.c.l.b16 %v379
    %v444 = vunpack.c.l.b16 %v380
    %v445 = vunpack.c.l.b16 %v381
    %v446 = vunpack.c.l.b16 %v382
    %v447 = vunpack.c.l.b16 %v383
    %v448 = vunpack.c.l.b16 %v384
    %v449 = vunpack.c.l.b16 %v385
    %v450 = vunpack.c.l.b16 %v386
    %v451 = vunpack.c.l.b16 %v387
    %v452 = vunpack.c.l.b16 %v388
    %v453 = vunpack.c.l.b16 %v389
    %v454 = vunpack.c.l.b16 %v390
    %v455 = vunpack.c.l.b16 %v391
    %v456 = vunpack.c.l.b16 %v392
    %v457 = vunpack.c.l.b16 %v393
    %v458 = vunpack.c.l.b16 %v394
    %v459 = vunpack.c.l.b16 %v395
    %v460 = vpack.c.b16 %v429, %v428
    %v461 = vpack.c.b16 %v431, %v430
    %v462 = vpack.c.b16 %v433, %v432
    %v463 = vpack.c.b16 %v435, %v434
    %v464 = vpack.c.b16 %v437, %v436
    %v465 = vpack.c.b16 %v439, %v438
    %v466 = vpack.c.b16 %v441, %v440
    %v467 = vpack.c.b16 %v443, %v442
    %v468 = vpack.c.b16 %v445, %v444
    %v469 = vpack.c.b16 %v447, %v446
    %v470 = vpack.c.b16 %v449, %v448
    %v471 = vpack.c.b16 %v451, %v450
    %v472 = vpack.c.b16 %v453, %v452
    %v473 = vpack.c.b16 %v455, %v454
    %v474 = vpack.c.b16 %v457, %v456
    %v475 = vpack.c.b16 %v459, %v458
    %492 = vmatprep.subr.bf16.mxu0 0
    %493 = vmatpush1.bf16.msra.mxu0 %v467
    %494 = vmatprep.subr.bf16.mxu0 0
    %495 = vmatpush1.bf16.msra.mxu0 %v466
    %496 = vmatprep.subr.bf16.mxu0 0
    %497 = vmatpush1.bf16.msra.mxu0 %v465
    %498 = vmatprep.subr.bf16.mxu0 0
    %499 = vmatpush1.bf16.msra.mxu0 %v464
    %500 = vmatprep.subr.bf16.mxu0 0
    %501 = vmatpush1.bf16.msra.mxu0 %v463
    %502 = vmatprep.subr.bf16.mxu0 0
    %503 = vmatpush1.bf16.msra.mxu0 %v462
    %504 = vmatprep.subr.bf16.mxu0 0
    %505 = vmatpush1.bf16.msra.mxu0 %v461
    %506 = vmatprep.subr.bf16.mxu0 0
    %507 = vmatpush1.bf16.msra.mxu0 %v460
    %508 = vmatprep.subr.bf16.mxu0 0
    %509 = vmatpush2.bf16.msra.mxu0 %v475
    %510 = vmatprep.subr.bf16.mxu0 0
    %511 = vmatpush2.bf16.msra.mxu0 %v474
    %512 = vmatprep.subr.bf16.mxu0 0
    %513 = vmatpush2.bf16.msra.mxu0 %v473
    %514 = vmatprep.subr.bf16.mxu0 0
    %515 = vmatpush2.bf16.msra.mxu0 %v472
    %516 = vmatprep.subr.bf16.mxu0 0
    %517 = vmatpush2.bf16.msra.mxu0 %v471
    %518 = vmatprep.subr.bf16.mxu0 0
    %519 = vmatpush2.bf16.msra.mxu0 %v470
    %520 = vmatprep.subr.bf16.mxu0 0
    %521 = vmatpush2.bf16.msra.mxu0 %v469
    %522 = vmatprep.subr.bf16.mxu0 0
    %523 = vmatpush2.bf16.msra.mxu0 %v468
    %524 = vmatprep.mubr.bf16.mxu0 %v363
    %525 = vmatmul.mubr.bf16.gmra.mxu0 %v362
    %v526 = vpop.f32.mrf.mxu0
    %v527 = vadd.f32 0.0, %v526
    %v528 = vpop.f32.mrf.mxu0
    %v529 = vpop.f32.mrf.mxu0
    %v530 = vpop.f32.mrf.mxu0
    %531 = vdwg.mxu0
    %v532 = vadd.f32 %v361, %v527
    %533 = vst [vmem:[#allocation2] sm:$0xff] %v532
    // Predicated region
    $region66: #{tpu_custom_call.1} parent=1 // pred_check
      %p534 = pneg %p356
    $region67: #{tpu_custom_call.1} parent=1 // pred_check_branch
      %536 = sbr.rel (%p534) target = $region69
    $region68: #{tpu_custom_call.1} parent=1 // pred_region
      %537 = vadd.xlane.f32.xlu0 %v132
      %v538 = vpop.xlane.xlu0 %537
      %v539 = vmax.f32 %v538, 1.0
      %v540 = vrcp.pop %v539
      %v541 = vld [vmem:[#allocation2] sm:$0xff]
      %v542 = vmul.f32 %v541, %v540
      %v543 = vld [vmem:[#allocation8] sm:$0xf]
      %v544 = vld [vmem:[#allocation8 + $0x4] sm:$0xf]
      %v545 = vld [vmem:[#allocation8 + $0x8] sm:$0xf]
      %v546 = vld [vmem:[#allocation8 + $0xc] sm:$0xf]
      %v547 = vld [vmem:[#allocation8 + $0x10] sm:$0xf]
      %v548 = vld [vmem:[#allocation8 + $0x14] sm:$0xf]
      %v549 = vld [vmem:[#allocation8 + $0x18] sm:$0xf]
      %v550 = vld [vmem:[#allocation8 + $0x1c] sm:$0xf]
      %v551 = vld [vmem:[#allocation8 + $0x20] sm:$0xf]
      %v552 = vld [vmem:[#allocation8 + $0x24] sm:$0xf]
      %v553 = vld [vmem:[#allocation8 + $0x28] sm:$0xf]
      %v554 = vld [vmem:[#allocation8 + $0x2c] sm:$0xf]
      %v555 = vld [vmem:[#allocation8 + $0x30] sm:$0xf]
      %v556 = vld [vmem:[#allocation8 + $0x34] sm:$0xf]
      %v557 = vld [vmem:[#allocation8 + $0x38] sm:$0xf]
      %v558 = vld [vmem:[#allocation8 + $0x3c] sm:$0xf]
      %v559 = vld [vmem:[#allocation9] sm:$0xff]
      %v560 = vpack.c.bf16 %v542, %v542
      %v577 = vunpack.c.l.b16 %v543
      %v578 = vunpack.c.l.b16 %v544
      %v579 = vunpack.c.l.b16 %v545
      %v580 = vunpack.c.l.b16 %v546
      %v581 = vunpack.c.l.b16 %v547
      %v582 = vunpack.c.l.b16 %v548
      %v583 = vunpack.c.l.b16 %v549
      %v584 = vunpack.c.l.b16 %v550
      %v585 = vunpack.c.l.b16 %v551
      %v586 = vunpack.c.l.b16 %v552
      %v587 = vunpack.c.l.b16 %v553
      %v588 = vunpack.c.l.b16 %v554
      %v589 = vunpack.c.l.b16 %v555
      %v590 = vunpack.c.l.b16 %v556
      %v591 = vunpack.c.l.b16 %v557
      %v592 = vunpack.c.l.b16 %v558
      %v593 = vpack.c.b16 %v578, %v577
      %v594 = vpack.c.b16 %v580, %v579
      %v595 = vpack.c.b16 %v582, %v581
      %v596 = vpack.c.b16 %v584, %v583
      %v597 = vpack.c.b16 %v586, %v585
      %v598 = vpack.c.b16 %v588, %v587
      %v599 = vpack.c.b16 %v590, %v589
      %v600 = vpack.c.b16 %v592, %v591
      %609 = vmatprep.subr.bf16.mxu0 0
      %610 = vmatpush1.bf16.msra.mxu0 %v600
      %611 = vmatprep.subr.bf16.mxu0 0
      %612 = vmatpush1.bf16.msra.mxu0 %v599
      %613 = vmatprep.subr.bf16.mxu0 0
      %614 = vmatpush1.bf16.msra.mxu0 %v598
      %615 = vmatprep.subr.bf16.mxu0 0
      %616 = vmatpush1.bf16.msra.mxu0 %v597
      %617 = vmatprep.subr.bf16.mxu0 0
      %618 = vmatpush1.bf16.msra.mxu0 %v596
      %619 = vmatprep.subr.bf16.mxu0 0
      %620 = vmatpush1.bf16.msra.mxu0 %v595
      %621 = vmatprep.subr.bf16.mxu0 0
      %622 = vmatpush1.bf16.msra.mxu0 %v594
      %623 = vmatprep.subr.bf16.mxu0 0
      %624 = vmatpush1.bf16.msra.mxu0 %v593
      %625 = vmatprep.subr.bf16.mxu0 0
      %626 = vmatpush2.bf16.msra.mxu0 0
      %627 = vmatprep.subr.bf16.mxu0 0
      %628 = vmatpush2.bf16.msra.mxu0 0
      %629 = vmatprep.subr.bf16.mxu0 0
      %630 = vmatpush2.bf16.msra.mxu0 0
      %631 = vmatprep.subr.bf16.mxu0 0
      %632 = vmatpush2.bf16.msra.mxu0 0
      %633 = vmatprep.subr.bf16.mxu0 0
      %634 = vmatpush2.bf16.msra.mxu0 0
      %635 = vmatprep.subr.bf16.mxu0 0
      %636 = vmatpush2.bf16.msra.mxu0 0
      %637 = vmatprep.subr.bf16.mxu0 0
      %638 = vmatpush2.bf16.msra.mxu0 0
      %639 = vmatprep.subr.bf16.mxu0 0
      %640 = vmatpush2.bf16.msra.mxu0 0
      %641 = vmatprep.mubr.bf16.mxu0 0
      %642 = vmatmul.mubr.bf16.gmra.mxu0 %v560
      %v643 = vpop.f32.mrf.mxu0
      %v644 = vadd.f32 %v559, %v643
      %v645 = vpop.f32.mrf.mxu0
      %v646 = vpop.f32.mrf.mxu0
      %v647 = vpop.f32.mrf.mxu0
      %648 = vdwg.mxu0
      %v649 = vmax.f32 %v644, 0.0
      %v650 = vld [vmem:[#allocation11] sm:$0xf]
      %v651 = vld [vmem:[#allocation11 + $0x4] sm:$0xf]
      %v652 = vld [vmem:[#allocation11 + $0x8] sm:$0xf]
      %v653 = vld [vmem:[#allocation11 + $0xc] sm:$0xf]
      %v654 = vld [vmem:[#allocation11 + $0x10] sm:$0xf]
      %v655 = vld [vmem:[#allocation11 + $0x14] sm:$0xf]
      %v656 = vld [vmem:[#allocation11 + $0x18] sm:$0xf]
      %v657 = vld [vmem:[#allocation11 + $0x1c] sm:$0xf]
      %v658 = vld [vmem:[#allocation11 + $0x20] sm:$0xf]
      %v659 = vld [vmem:[#allocation11 + $0x24] sm:$0xf]
      %v660 = vld [vmem:[#allocation11 + $0x28] sm:$0xf]
      %v661 = vld [vmem:[#allocation11 + $0x2c] sm:$0xf]
      %v662 = vld [vmem:[#allocation11 + $0x30] sm:$0xf]
      %v663 = vld [vmem:[#allocation11 + $0x34] sm:$0xf]
      %v664 = vld [vmem:[#allocation11 + $0x38] sm:$0xf]
      %v665 = vld [vmem:[#allocation11 + $0x3c] sm:$0xf]
      %v666 = vld [vmem:[%s5] sm:$0xff]
      %v667 = vpack.c.bf16 %v649, %v649
      %v684 = vunpack.c.l.b16 %v650
      %v685 = vunpack.c.l.b16 %v651
      %v686 = vunpack.c.l.b16 %v652
      %v687 = vunpack.c.l.b16 %v653
      %v688 = vunpack.c.l.b16 %v654
      %v689 = vunpack.c.l.b16 %v655
      %v690 = vunpack.c.l.b16 %v656
      %v691 = vunpack.c.l.b16 %v657
      %v692 = vunpack.c.l.b16 %v658
      %v693 = vunpack.c.l.b16 %v659
      %v694 = vunpack.c.l.b16 %v660
      %v695 = vunpack.c.l.b16 %v661
      %v696 = vunpack.c.l.b16 %v662
      %v697 = vunpack.c.l.b16 %v663
      %v698 = vunpack.c.l.b16 %v664
      %v699 = vunpack.c.l.b16 %v665
      %v700 = vpack.c.b16 %v685, %v684
      %v701 = vpack.c.b16 %v687, %v686
      %v702 = vpack.c.b16 %v689, %v688
      %v703 = vpack.c.b16 %v691, %v690
      %v704 = vpack.c.b16 %v693, %v692
      %v705 = vpack.c.b16 %v695, %v694
      %v706 = vpack.c.b16 %v697, %v696
      %v707 = vpack.c.b16 %v699, %v698
      %716 = vmatprep.subr.bf16.mxu0 0
      %717 = vmatpush1.bf16.msra.mxu0 %v707
      %718 = vmatprep.subr.bf16.mxu0 0
      %719 = vmatpush1.bf16.msra.mxu0 %v706
      %720 = vmatprep.subr.bf16.mxu0 0
      %721 = vmatpush1.bf16.msra.mxu0 %v705
      %722 = vmatprep.subr.bf16.mxu0 0
      %723 = vmatpush1.bf16.msra.mxu0 %v704
      %724 = vmatprep.subr.bf16.mxu0 0
      %725 = vmatpush1.bf16.msra.mxu0 %v703
      %726 = vmatprep.subr.bf16.mxu0 0
      %727 = vmatpush1.bf16.msra.mxu0 %v702
      %728 = vmatprep.subr.bf16.mxu0 0
      %729 = vmatpush1.bf16.msra.mxu0 %v701
      %730 = vmatprep.subr.bf16.mxu0 0
      %731 = vmatpush1.bf16.msra.mxu0 %v700
      %732 = vmatprep.subr.bf16.mxu0 0
      %733 = vmatpush2.bf16.msra.mxu0 0
      %734 = vmatprep.subr.bf16.mxu0 0
      %735 = vmatpush2.bf16.msra.mxu0 0
      %736 = vmatprep.subr.bf16.mxu0 0
      %737 = vmatpush2.bf16.msra.mxu0 0
      %738 = vmatprep.subr.bf16.mxu0 0
      %739 = vmatpush2.bf16.msra.mxu0 0
      %740 = vmatprep.subr.bf16.mxu0 0
      %741 = vmatpush2.bf16.msra.mxu0 0
      %742 = vmatprep.subr.bf16.mxu0 0
      %743 = vmatpush2.bf16.msra.mxu0 0
      %744 = vmatprep.subr.bf16.mxu0 0
      %745 = vmatpush2.bf16.msra.mxu0 0
      %746 = vmatprep.subr.bf16.mxu0 0
      %747 = vmatpush2.bf16.msra.mxu0 0
      %748 = vmatprep.mubr.bf16.mxu0 0
      %749 = vmatmul.mubr.bf16.gmra.mxu0 %v667
      %v750 = vpop.f32.mrf.mxu0
      %v751 = vadd.f32 %v666, %v750
      %v752 = vpop.f32.mrf.mxu0
      %v753 = vpop.f32.mrf.mxu0
      %v754 = vpop.f32.mrf.mxu0
      %755 = vdwg.mxu0
      %v756 = vmax.f32 %v751, 0.0
      %v757 = vld [vmem:[#allocation12] sm:$0xf]
      %v758 = vld [vmem:[#allocation12 + $0x4] sm:$0xf]
      %v759 = vld [vmem:[#allocation12 + $0x8] sm:$0xf]
      %v760 = vld [vmem:[#allocation12 + $0xc] sm:$0xf]
      %v761 = vld [vmem:[#allocation12 + $0x10] sm:$0xf]
      %v762 = vld [vmem:[#allocation12 + $0x14] sm:$0xf]
      %v763 = vld [vmem:[#allocation12 + $0x18] sm:$0xf]
      %v764 = vld [vmem:[#allocation12 + $0x1c] sm:$0xf]
      %v765 = vld [vmem:[#allocation12 + $0x20] sm:$0xf]
      %v766 = vld [vmem:[#allocation12 + $0x24] sm:$0xf]
      %v767 = vld [vmem:[#allocation12 + $0x28] sm:$0xf]
      %v768 = vld [vmem:[#allocation12 + $0x2c] sm:$0xf]
      %v769 = vld [vmem:[#allocation12 + $0x30] sm:$0xf]
      %v770 = vld [vmem:[#allocation12 + $0x34] sm:$0xf]
      %v771 = vld [vmem:[#allocation12 + $0x38] sm:$0xf]
      %v772 = vld [vmem:[#allocation12 + $0x3c] sm:$0xf]
      %v773 = vld [vmem:[#allocation14] sm:$0xff]
      %v774 = vpack.c.bf16 %v756, %v756
      %v791 = vunpack.c.l.b16 %v757
      %v792 = vunpack.c.l.b16 %v758
      %v793 = vunpack.c.l.b16 %v759
      %v794 = vunpack.c.l.b16 %v760
      %v795 = vunpack.c.l.b16 %v761
      %v796 = vunpack.c.l.b16 %v762
      %v797 = vunpack.c.l.b16 %v763
      %v798 = vunpack.c.l.b16 %v764
      %v799 = vunpack.c.l.b16 %v765
      %v800 = vunpack.c.l.b16 %v766
      %v801 = vunpack.c.l.b16 %v767
      %v802 = vunpack.c.l.b16 %v768
      %v803 = vunpack.c.l.b16 %v769
      %v804 = vunpack.c.l.b16 %v770
      %v805 = vunpack.c.l.b16 %v771
      %v806 = vunpack.c.l.b16 %v772
      %v807 = vpack.c.b16 %v792, %v791
      %v808 = vpack.c.b16 %v794, %v793
      %v809 = vpack.c.b16 %v796, %v795
      %v810 = vpack.c.b16 %v798, %v797
      %v811 = vpack.c.b16 %v800, %v799
      %v812 = vpack.c.b16 %v802, %v801
      %v813 = vpack.c.b16 %v804, %v803
      %v814 = vpack.c.b16 %v806, %v805
      %823 = vmatprep.subr.bf16.mxu0 0
      %824 = vmatpush1.bf16.msra.mxu0 %v814
      %825 = vmatprep.subr.bf16.mxu0 0
      %826 = vmatpush1.bf16.msra.mxu0 %v813
      %827 = vmatprep.subr.bf16.mxu0 0
      %828 = vmatpush1.bf16.msra.mxu0 %v812
      %829 = vmatprep.subr.bf16.mxu0 0
      %830 = vmatpush1.bf16.msra.mxu0 %v811
      %831 = vmatprep.subr.bf16.mxu0 0
      %832 = vmatpush1.bf16.msra.mxu0 %v810
      %833 = vmatprep.subr.bf16.mxu0 0
      %834 = vmatpush1.bf16.msra.mxu0 %v809
      %835 = vmatprep.subr.bf16.mxu0 0
      %836 = vmatpush1.bf16.msra.mxu0 %v808
      %837 = vmatprep.subr.bf16.mxu0 0
      %838 = vmatpush1.bf16.msra.mxu0 %v807
      %839 = vmatprep.subr.bf16.mxu0 0
      %840 = vmatpush2.bf16.msra.mxu0 0
      %841 = vmatprep.subr.bf16.mxu0 0
      %842 = vmatpush2.bf16.msra.mxu0 0
      %843 = vmatprep.subr.bf16.mxu0 0
      %844 = vmatpush2.bf16.msra.mxu0 0
      %845 = vmatprep.subr.bf16.mxu0 0
      %846 = vmatpush2.bf16.msra.mxu0 0
      %847 = vmatprep.subr.bf16.mxu0 0
      %848 = vmatpush2.bf16.msra.mxu0 0
      %849 = vmatprep.subr.bf16.mxu0 0
      %850 = vmatpush2.bf16.msra.mxu0 0
      %851 = vmatprep.subr.bf16.mxu0 0
      %852 = vmatpush2.bf16.msra.mxu0 0
      %853 = vmatprep.subr.bf16.mxu0 0
      %854 = vmatpush2.bf16.msra.mxu0 0
      %855 = vmatprep.mubr.bf16.mxu0 0
      %856 = vmatmul.mubr.bf16.gmra.mxu0 %v774
      %v857 = vpop.f32.mrf.mxu0
      %v858 = vadd.f32 %v773, %v857
      %v859 = vpop.f32.mrf.mxu0
      %v860 = vpop.f32.mrf.mxu0
      %v861 = vpop.f32.mrf.mxu0
      %862 = vdwg.mxu0
      %863 = vst [vmem:[#allocation15] sm:$0xff] %v858
    $region69: #{tpu_custom_call.1} parent=1 // pred_fallthru
      _
    // Predicated region
    $region70: #{tpu_custom_call.1} parent=1 // pred_check
      _
    $region71: #{tpu_custom_call.1} parent=1 // pred_check_branch
      %865 = sbr.rel (0) target = $region73
    $region72: #{tpu_custom_call.1} parent=1 // pred_region
      %s867 = ssub.s32 128, 128
      %868 = vsyncadd [#allocation5], %s867
      %s870 = sshll.u32 [#allocation15], 4
      %s871 = int_to_ptr.vmem [resolvable:$true] %s870
      %873 = dma.vmem_to_hbm [thread:$0]  %s871, 128, %s8, [#allocation5]
    $region73: #{tpu_custom_call.1} parent=1 // pred_fallthru
      _
    // Predicated region
    $region74: #{tpu_custom_call.1} parent=1 // pred_check
      _
    $region75: #{tpu_custom_call.1} parent=1 // pred_check_branch
      %875 = sbr.rel (0) target = $region77
    $region76: #{tpu_custom_call.1} parent=1 // pred_region
      %876 = dma.done [#allocation5], 128
    $region77: #{tpu_custom_call.1} parent=1 // pred_fallthru
      _
    %877 = vsyncpa [#allocation4], 1
    %878 = vsyncpa [#allocation7], 1
    %879 = vsyncpa [#allocation10], 1
    %880 = vsyncpa [#allocation13], 1
    %881 = vsyncpa [#allocation5], 1

</llo_original>
